<compile_context>
chip_gen: v7x
topology: tpu7x:2x2x1
jax: 0.10.0
libtpu: 0.0.40
codegen_flags: <defaults>
</compile_context>

<pallas_src>
import jax
import jax.numpy as jnp
from jax.experimental import pallas as pl
from jax.experimental.pallas import tpu as pltpu


def _make_hbm_copy_kernel(chunks):
    """Build a kernel issuing direct HBM->HBM DMA copies.

    `chunks` is None for a single whole-array DMA, or a list of
    (start, size) pairs along the leading axis for overlapped DMAs.
    """

    def kernel(x_hbm, o_hbm, sem):
        if chunks is None:
            # Single whole-array DMA (also covers 0-d / small inputs).
            pltpu.make_async_copy(x_hbm, o_hbm, sem.at[0]).start()
            pltpu.make_async_copy(x_hbm, o_hbm, sem.at[0]).wait()
        else:
            # Start every chunk first so the DMAs overlap, then wait on all.
            for i, (start, size) in enumerate(chunks):
                pltpu.make_async_copy(
                    x_hbm.at[pl.ds(start, size)],
                    o_hbm.at[pl.ds(start, size)],
                    sem.at[i],
                ).start()
            for i, (start, size) in enumerate(chunks):
                pltpu.make_async_copy(
                    x_hbm.at[pl.ds(start, size)],
                    o_hbm.at[pl.ds(start, size)],
                    sem.at[i],
                ).wait()

    return kernel


def _pallas_identity_copy(x, *, min_chunk_bytes=4 << 20):
    """Materializing identity copy: direct HBM->HBM DMA(s), no VMEM transit."""
    itemsize = jnp.dtype(x.dtype).itemsize
    nbytes = x.size * itemsize

    # Split the leading axis into up to 4 concurrent DMAs only when the array
    # is big enough for the overlap to matter; otherwise one whole-array DMA.
    if x.ndim >= 1 and x.shape[0] >= 2 and nbytes >= min_chunk_bytes:
        n_chunks = min(4, x.shape[0])
        base = pl.cdiv(x.shape[0], n_chunks)
        chunks = []
        start = 0
        while start < x.shape[0]:
            size = min(base, x.shape[0] - start)
            chunks.append((start, size))
            start += size
        n_sems = len(chunks)
    else:
        chunks = None
        n_sems = 1

    kernel = _make_hbm_copy_kernel(chunks)

    return pl.pallas_call(
        kernel,
        out_shape=jax.ShapeDtypeStruct(x.shape, x.dtype),
        in_specs=[pl.BlockSpec(memory_space=pl.ANY)],
        out_specs=pl.BlockSpec(memory_space=pl.ANY),
        scratch_shapes=[pltpu.SemaphoreType.DMA((n_sems,))],
        cost_estimate=pl.CostEstimate(
            flops=0, transcendentals=0, bytes_accessed=2 * nbytes
        ),
    )(x)


def print_layer(x, *, materialize=False):
    """Pallas implementation of PrintLayer.forward.

    Prints the (static) shape and returns the input unchanged.

    Default (materialize=False) is the zero-copy production path: pure
    pass-through with no HBM traffic. materialize=True forces an explicit
    copy via a direct HBM->HBM DMA Pallas kernel (kept so the kernel is
    exercised / in case a distinct output buffer is required).

    Note: the print happens at Python trace time, so under jit it prints once
    per trace/compile rather than once per call (TODO(synk): no in-device
    per-call host print equivalent without a host callback).
    """
    print(tuple(x.shape))

    if not materialize:
        return x
    return _pallas_identity_copy(x)


if __name__ == "__main__":
    key = jax.random.PRNGKey(0)

    # Small NCHW input consistent with typical conv-net usage of PrintLayer.
    x = jax.random.normal(key, (2, 4, 16, 16), dtype=jnp.float32)

    # Zero-copy (default, production-optimal) path.
    y0 = print_layer(x)
    assert y0 is x

    # Materializing path: single whole-array HBM->HBM DMA.
    y = jax.block_until_ready(print_layer(x, materialize=True))
    assert y.shape == x.shape and y.dtype == x.dtype
    assert bool(jnp.all(y == x))

    # Exercise the overlapped multi-DMA path (force chunking on a small array
    # by lowering the byte threshold; leading dim 2 -> 2 concurrent DMAs).
    y2 = jax.block_until_ready(_pallas_identity_copy(x, min_chunk_bytes=0))
    assert y2.shape == x.shape and y2.dtype == x.dtype
    assert bool(jnp.all(y2 == x))

    # Sub-32-bit dtype: DMA is dtype-agnostic, no layout/padding work needed.
    xb = jax.random.normal(key, (2, 4, 16, 16), dtype=jnp.bfloat16)
    yb = jax.block_until_ready(print_layer(xb, materialize=True))
    assert yb.shape == xb.shape and yb.dtype == xb.dtype
    assert bool(jnp.all(yb == xb))

    # Ragged shape (not a multiple of 128): no pad/slice passes, direct DMA.
    xr = jax.random.normal(key, (3, 5, 7), dtype=jnp.float32)
    yr = jax.block_until_ready(print_layer(xr, materialize=True))
    assert yr.shape == xr.shape and yr.dtype == xr.dtype
    assert bool(jnp.all(yr == xr))

    print("KERNEL_OK")
</pallas_src>

<mosaic_0001>
module attributes {stable_mosaic.version = 11 : i64} {
  func.func @kernel(%arg0: memref<2x4x16x16xf32, #tpu.memory_space<any>>, %arg1: memref<2x4x16x16xf32, #tpu.memory_space<any>>, %arg2: memref<1x!tpu.dma_semaphore, #tpu.memory_space<semaphore_mem>>) attributes {dimension_semantics = [], scalar_prefetch = 0 : i64, scratch_operands = 1 : i64, tpu.core_type = #tpu.core_type<tc>} {
    %c0_i32 = arith.constant 0 : i32
    %0 = tpu.memref_slice %arg2[%c0_i32] : memref<1x!tpu.dma_semaphore, #tpu.memory_space<semaphore_mem>> -> memref<1x!tpu.dma_semaphore, #tpu.memory_space<semaphore_mem>>
    %1 = tpu.memref_squeeze %0 : memref<1x!tpu.dma_semaphore, #tpu.memory_space<semaphore_mem>> -> memref<!tpu.dma_semaphore, #tpu.memory_space<semaphore_mem>>
    tpu.enqueue_dma source(%arg0 : memref<2x4x16x16xf32, #tpu.memory_space<any>>) target(%arg1 : memref<2x4x16x16xf32, #tpu.memory_space<any>>) target_semaphore(%1 : memref<!tpu.dma_semaphore, #tpu.memory_space<semaphore_mem>>)
    %c0_i32_0 = arith.constant 0 : i32
    %2 = tpu.memref_slice %arg2[%c0_i32_0] : memref<1x!tpu.dma_semaphore, #tpu.memory_space<semaphore_mem>> -> memref<1x!tpu.dma_semaphore, #tpu.memory_space<semaphore_mem>>
    %3 = tpu.memref_squeeze %2 : memref<1x!tpu.dma_semaphore, #tpu.memory_space<semaphore_mem>> -> memref<!tpu.dma_semaphore, #tpu.memory_space<semaphore_mem>>
    tpu.wait_dma2 semaphore(%3 : memref<!tpu.dma_semaphore, #tpu.memory_space<semaphore_mem>>) src(%arg0 : memref<2x4x16x16xf32, #tpu.memory_space<any>>) dst(%arg1 : memref<2x4x16x16xf32, #tpu.memory_space<any>>)
    return
  }
}

</mosaic_0001>

<llo_original>
// kernel: tpu_custom_call.1
$region0: #{tpu_custom_call.1}
  #allocation0 [shape = 'u32[]', space=smem, size = 0x4, offset = 0x4, fixed_abs, tag = 'smem constant byte address 0x4 - core index']
  #allocation1 [shape = 'u32[144,128]{1,0:T(1,128)}', space=vmem, size = 0x12000, scoped, tag = 'internal scratch']
  #allocation2 [shape = 's32[1]{0}', space=sflag, size = 0x4, scoped, tag = 'scratch operand']
  #allocation3 [shape = 's32[]', space=sflag, size = 0x4, offset = 0, fixed_abs, tag = 'sflag constant byte address 0x0 - dummy sync flag']
  #allocation4 [shape = 'u32[0]{0}', space=smem, size = 0, offset = 0, fixed_abs, tag = 'smem constant byte address 0x0 - null']
  %s0 = inlined_call_operand.hbm [shape: f32[2,4,16,16], index: 0, kind: input, shape index: {}]
  %s1 = inlined_call_operand.hbm [shape: f32[2,4,16,16], index: 1, kind: output, shape index: {}]
  %s2 = sld [smem:[#allocation0]]
  $region2: #{tpu_custom_call.1} parent=0
    _
  %s4 = ssub.s32 1, %s2
  %s5 = scalar_select 0, %s4, %s2
  %s7 = sshll.u32 1, 14
  %s8 = sxor.u32 4294967295, %s7
  %s11 = sshll.u32 3, 24
  %s12 = sxor.u32 4294967295, %s11
  %s13 = sand.u32 0, %s12
  %s15 = sor.u32 %s13, 0
  %18 = dma.general %s0, 2048, %s1, [#allocation2], [#allocation3], [#allocation4], %s15, 0
  %s19 = smul.u32 2, 4
  %s20 = smul.u32 %s19, 16
  %s21 = smul.u32 %s20, 1
  %s22 = sshll.u32 %s21, 4
  %23 = dma.done [#allocation2], %s22
  %24 = vsyncmov [#allocation2]
  %s25 = vpop.sfrf %24
  %p26 = scmp.eq.s32.totalorder %s25, 0
  %p27 = pneg %p26
  %29 = shalt.err (%p27)

</llo_original>
